<compile_context>
chip_gen: v5e
topology: v5e:2x2
jax: 0.10.0
libtpu: 0.0.40
codegen_flags: <defaults>
</compile_context>

<pallas_src>
import functools

import jax
import jax.numpy as jnp
from jax.experimental import pallas as pl
from jax.experimental.pallas import tpu as pltpu

_LANES = 128
_SUBLANES = 8


# ---------------------------------------------------------------------------
# Kernel: each grid step writes its own (8, 128) partial sum of (p - t)^2
# ---------------------------------------------------------------------------
def _sse_kernel(p_ref, t_ref, o_ref, *, total_rows, needs_mask):
    step = pl.program_id(0)
    tr, lanes = p_ref.shape  # static block shape

    # In-VMEM upcast (VPU, free); inputs stay in their native dtype in HBM.
    diff = p_ref[...].astype(jnp.float32) - t_ref[...].astype(jnp.float32)
    sq = diff * diff

    def _fold(x):
        # (tr, 128) -> (8, 128) with VALU adds only; the natural (8,128) tile
        # grouping makes this reshape layout-free.  Cross-lane reduce is left
        # to the wrapper.
        return jnp.sum(x.reshape(tr // _SUBLANES, _SUBLANES, lanes), axis=0)

    if needs_mask:
        # Only the globally-last tile can overshoot the array; keep the
        # iota/compare/select off the hot path of every other step.
        is_last = step == pl.num_programs(0) - 1

        @pl.when(jnp.logical_not(is_last))
        def _full():
            o_ref[...] = _fold(sq)

        @pl.when(is_last)
        def _partial():
            row = jax.lax.broadcasted_iota(jnp.int32, (tr, lanes), 0)
            valid = (step * tr + row) < total_rows
            o_ref[...] = _fold(jnp.where(valid, sq, 0.0))
    else:
        o_ref[...] = _fold(sq)


def _round_up(x, m):
    return ((x + m - 1) // m) * m


def _vmem_cap_bytes():
    """Generation-aware scoped-VMEM budget with headroom for compiler scratch."""
    try:
        phys = int(pltpu.get_tpu_info().vmem_capacity_bytes)
    except Exception:
        phys = 64 << 20  # conservative: v7x physical VMEM
    return min(int(phys * 0.72), 100 << 20)


# ---------------------------------------------------------------------------
# Wrapper
# ---------------------------------------------------------------------------
def supervised_loss(prediction, truth, *, tile_rows=None):
    """((prediction - truth) ** 2).mean() * 25000 via a Pallas TPU kernel."""
    assert prediction.shape == truth.shape, "prediction/truth shape mismatch"
    n_true = prediction.size
    if n_true == 0:
        # Matches torch: mean of an empty tensor is NaN.
        return jnp.float32(float("nan"))

    p_flat = jnp.ravel(prediction)  # contiguous ravel: layout-only
    t_flat = jnp.ravel(truth)

    rows = n_true // _LANES          # full 128-lane rows
    n_main = rows * _LANES

    # Tail (< 128 elements): negligible, do it in plain JAX.
    if n_main < n_true:
        # TODO(synk): for non-128-aligned sizes the prefix slice below costs
        # one extra HBM pass of both operands; a zero-copy path would need
        # memory_space=pl.ANY + manual ragged DMA.  Aligned sizes pay nothing.
        d_tail = (p_flat[n_main:].astype(jnp.float32)
                  - t_flat[n_main:].astype(jnp.float32))
        sse_tail = jnp.sum(d_tail * d_tail)
    else:
        sse_tail = jnp.float32(0.0)

    if rows == 0:
        sse_main = jnp.float32(0.0)
    else:
        itemsize = max(p_flat.dtype.itemsize, t_flat.dtype.itemsize)
        if tile_rows is None:
            # ~4 MiB per input per pipeline buffer; narrower dtypes get more rows.
            tile_rows = (4 << 20) // (_LANES * itemsize)

        # Clamp the tile to the input and align it to 8 sublanes.
        tr = min(int(tile_rows), _round_up(rows, _SUBLANES))
        tr = _round_up(max(tr, _SUBLANES), _SUBLANES)
        n_tiles = int(pl.cdiv(rows, tr))
        needs_mask = (rows % tr) != 0

        # When n_true is 128-aligned these are pure layout changes (no copy).
        p2d = p_flat[:n_main].reshape(rows, _LANES)
        t2d = t_flat[:n_main].reshape(rows, _LANES)

        # Scoped-VMEM: 2 inputs x 2 pipeline buffers + f32 temporaries + slack,
        # floored at 16 MiB and capped by the hardware-derived budget.
        in_bytes = tr * _LANES * (p2d.dtype.itemsize + t2d.dtype.itemsize)
        vmem_need = 2 * in_bytes + 2 * tr * _LANES * 4 + (4 << 20)
        vmem_limit = int(min(max(vmem_need, 16 << 20), _vmem_cap_bytes()))

        kernel = functools.partial(
            _sse_kernel, total_rows=rows, needs_mask=needs_mask)

        cost = pl.CostEstimate(
            flops=3 * n_main,  # sub + mul + fold-add per element
            transcendentals=0,
            bytes_accessed=(n_main * (p2d.dtype.itemsize + t2d.dtype.itemsize)
                            + n_tiles * _SUBLANES * _LANES * 4),
        )

        partials = pl.pallas_call(
            kernel,
            out_shape=jax.ShapeDtypeStruct(
                (n_tiles * _SUBLANES, _LANES), jnp.float32),
            grid_spec=pltpu.PrefetchScalarGridSpec(
                num_scalar_prefetch=0,
                grid=(n_tiles,),
                in_specs=[
                    pl.BlockSpec((tr, _LANES), lambda i: (i, 0)),
                    pl.BlockSpec((tr, _LANES), lambda i: (i, 0)),
                ],
                out_specs=pl.BlockSpec((_SUBLANES, _LANES), lambda i: (i, 0)),
            ),
            compiler_params=pltpu.CompilerParams(
                # Steps are independent (each writes its own partial block):
                # "parallel" lets v7x shard them across both TensorCores.
                dimension_semantics=("parallel",),
                vmem_limit_bytes=vmem_limit,
            ),
            cost_estimate=cost,
        )(p2d, t2d)

        # Final 1024*n_tiles-element reduce is tiny; do it in plain JAX.
        sse_main = jnp.sum(partials)

    # Apply the mean + 25000 scale in the wrapper (zero in-kernel cost).
    return (sse_main + sse_tail) * jnp.float32(25000.0 / n_true)


# ---------------------------------------------------------------------------
# Demo / self-check
# ---------------------------------------------------------------------------
if __name__ == "__main__":
    key = jax.random.PRNGKey(0)
    k_pred, k_truth = jax.random.split(key)

    # Small NCHW-like vector-field prediction.
    shape = (2, 4, 16, 16)
    prediction = jax.random.normal(k_pred, shape, dtype=jnp.float32)
    truth = jax.random.normal(k_truth, shape, dtype=jnp.float32)

    loss = supervised_loss(prediction, truth)
    loss = jax.block_until_ready(loss)

    # Reference check in plain JAX (same semantics as the PyTorch module).
    ref = jnp.mean((prediction - truth) ** 2) * 25000.0
    assert jnp.allclose(loss, ref, rtol=1e-5, atol=1e-3), (loss, ref)

    print("KERNEL_OK")
</pallas_src>

<mosaic_0001>
module attributes {stable_mosaic.version = 11 : i64} {
  func.func @_sse_kernel(%arg0: i32, %arg1: memref<16x128xf32, #tpu.memory_space<vmem>>, %arg2: memref<16x128xf32, #tpu.memory_space<vmem>>, %arg3: memref<8x128xf32, #tpu.memory_space<vmem>>) attributes {dimension_semantics = [#tpu.dimension_semantics<parallel>], iteration_bounds = array<i64: 1>, scalar_prefetch = 0 : i64, scratch_operands = 0 : i64, tpu.core_type = #tpu.core_type<tc>, window_params = [{transform_indices = @transform_0, window_bounds = array<i64: 16, 128>}, {transform_indices = @transform_1, window_bounds = array<i64: 16, 128>}, {transform_indices = @transform_2, window_bounds = array<i64: 8, 128>}]} {
    %c0 = arith.constant 0 : index
    %c0_0 = arith.constant 0 : index
    %0 = vector.load %arg1[%c0, %c0_0] : memref<16x128xf32, #tpu.memory_space<vmem>>, vector<16x128xf32>
    %c0_1 = arith.constant 0 : index
    %c0_2 = arith.constant 0 : index
    %1 = vector.load %arg2[%c0_1, %c0_2] : memref<16x128xf32, #tpu.memory_space<vmem>>, vector<16x128xf32>
    %2 = arith.subf %0, %1 : vector<16x128xf32>
    %3 = arith.mulf %2, %2 : vector<16x128xf32>
    %4 = vector.shape_cast %3 : vector<16x128xf32> to vector<2x8x128xf32>
    %cst = arith.constant dense<0.000000e+00> : vector<8x128xf32>
    %5 = vector.multi_reduction <add>, %4, %cst [0] : vector<2x8x128xf32> to vector<8x128xf32>
    %c0_3 = arith.constant 0 : index
    %c0_4 = arith.constant 0 : index
    %6 = vector.load %arg3[%c0_3, %c0_4] : memref<8x128xf32, #tpu.memory_space<vmem>>, vector<8x128xf32>
    tpu.vector_store %arg3[%c0_3, %c0_4], %5 {strides = array<i32>} : memref<8x128xf32, #tpu.memory_space<vmem>>, vector<8x128xf32>,
    return
  }
  func.func @transform_0(%arg0: i32) -> (i32, i32) {
    %c0_i32 = arith.constant 0 : i32
    %c0_i32_0 = arith.constant 0 : i32
    return %arg0, %c0_i32 : i32, i32
  }
  func.func @transform_1(%arg0: i32) -> (i32, i32) {
    %c0_i32 = arith.constant 0 : i32
    %c0_i32_0 = arith.constant 0 : i32
    return %arg0, %c0_i32 : i32, i32
  }
  func.func @transform_2(%arg0: i32) -> (i32, i32) {
    %c0_i32 = arith.constant 0 : i32
    %c0_i32_0 = arith.constant 0 : i32
    return %arg0, %c0_i32 : i32, i32
  }
}

</mosaic_0001>

<llo_original>
// kernel: tpu_custom_call.1
$region0: #{tpu_custom_call.1}
  #allocation0 [shape = 'u32[]', space=smem, size = 0x4, offset = 0x4, fixed_abs, tag = 'smem constant byte address 0x4 - core index']
  #allocation1 [shape = 'u32[72,128]{1,0:T(1,128)}', space=vmem, size = 0x9000, scoped, tag = 'internal scratch']
  %s0 = inlined_call_operand.hbm [shape: f32[16,128], index: 0, kind: input, shape index: {}]
  %s1 = inlined_call_operand.hbm [shape: f32[16,128], index: 1, kind: input, shape index: {}]
  %s2 = inlined_call_operand.hbm [shape: f32[8,128], index: 2, kind: output, shape index: {}]
  %s3 = sld [smem:[#allocation0]]
  $region26: #{tpu_custom_call.1} parent=0
    _
  %s5 = ssub.s32 1, %s3
  %s6 = scalar_select 0, %s5, %s3
  $region1: #{tpu_custom_call.1} parent=0
    #allocation2 [shape = 'u8[8192]{0}', space=vmem, size = 0x2000, scoped, tag = 'input window, operand 0, single buffered']
    #allocation3 [shape = 's32[1]{0}', space=sflag, size = 0x4, scoped, tag = 'scoped memory for tpu_custom_call.1']
    #allocation4 [shape = 's32[1]{0}', space=sflag, size = 0x4, scoped, tag = 'scoped memory for tpu_custom_call.1']
    #allocation5 [shape = 'u8[8192]{0}', space=vmem, size = 0x2000, scoped, tag = 'input window, operand 1, single buffered']
    #allocation6 [shape = 's32[1]{0}', space=sflag, size = 0x4, scoped, tag = 'scoped memory for tpu_custom_call.1']
    #allocation7 [shape = 'u8[4096]{0}', space=vmem, size = 0x1000, scoped, tag = 'output window, operand 0, single buffered']
    %7 = vsyncpa [#allocation3], 0
    %8 = vsyncpa [#allocation6], 0
    %9 = vsyncpa [#allocation4], 0
    // Predicated region
    $region2: #{tpu_custom_call.1} parent=1 // pred_check
      _
    $region3: #{tpu_custom_call.1} parent=1 // pred_check_branch
      %11 = sbr.rel (0) target = $region5
    $region4: #{tpu_custom_call.1} parent=1 // pred_region
      %13 = vsyncadd [#allocation3], 0
      %s14 = sshll.u32 %s0, 4
      %s15 = int_to_ptr.hbm [resolvable:$true] %s14
      %s16 = sshll.u32 [#allocation2], 4
      %s17 = int_to_ptr.vmem [resolvable:$true] %s16
      %22 = dma.hbm_to_vmem [thread:$0]  %s15, 256, %s17, [#allocation3], 128, 128, 8
    $region5: #{tpu_custom_call.1} parent=1 // pred_fallthru
      _
    // Predicated region
    $region6: #{tpu_custom_call.1} parent=1 // pred_check
      _
    $region7: #{tpu_custom_call.1} parent=1 // pred_check_branch
      %24 = sbr.rel (0) target = $region9
    $region8: #{tpu_custom_call.1} parent=1 // pred_region
      %26 = vsyncadd [#allocation6], 0
      %s27 = sshll.u32 %s1, 4
      %s28 = int_to_ptr.hbm [resolvable:$true] %s27
      %s29 = sshll.u32 [#allocation5], 4
      %s30 = int_to_ptr.vmem [resolvable:$true] %s29
      %35 = dma.hbm_to_vmem [thread:$0]  %s28, 256, %s30, [#allocation6], 128, 128, 8
    $region9: #{tpu_custom_call.1} parent=1 // pred_fallthru
      _
    // Predicated region
    $region10: #{tpu_custom_call.1} parent=1 // pred_check
      _
    $region11: #{tpu_custom_call.1} parent=1 // pred_check_branch
      %37 = sbr.rel (0) target = $region13
    $region12: #{tpu_custom_call.1} parent=1 // pred_region
      %39 = dma.done [#allocation3], 256
    $region13: #{tpu_custom_call.1} parent=1 // pred_fallthru
      _
    // Predicated region
    $region14: #{tpu_custom_call.1} parent=1 // pred_check
      _
    $region15: #{tpu_custom_call.1} parent=1 // pred_check_branch
      %41 = sbr.rel (0) target = $region17
    $region16: #{tpu_custom_call.1} parent=1 // pred_region
      %43 = dma.done [#allocation6], 256
    $region17: #{tpu_custom_call.1} parent=1 // pred_fallthru
      _
    %v44 = vld [vmem:[#allocation2] sm:$0xff]
    %v45 = vld [vmem:[#allocation2 + $0x8] sm:$0xff]
    %v46 = vld [vmem:[#allocation5] sm:$0xff]
    %v47 = vld [vmem:[#allocation5 + $0x8] sm:$0xff]
    %v48 = vsub.f32 %v44, %v46
    %v49 = vsub.f32 %v45, %v47
    %v50 = vmul.f32 %v48, %v48
    %v51 = vmul.f32 %v49, %v49
    %v52 = vadd.f32 %v50, %v51
    %53 = vst [vmem:[#allocation7] sm:$0xff] %v52
    // Predicated region
    $region18: #{tpu_custom_call.1} parent=1 // pred_check
      _
    $region19: #{tpu_custom_call.1} parent=1 // pred_check_branch
      %55 = sbr.rel (0) target = $region21
    $region20: #{tpu_custom_call.1} parent=1 // pred_region
      %57 = vsyncadd [#allocation4], 0
      %s59 = sshll.u32 [#allocation7], 4
      %s60 = int_to_ptr.vmem [resolvable:$true] %s59
      %s61 = sshll.u32 %s2, 4
      %s62 = int_to_ptr.hbm [resolvable:$true] %s61
      %64 = dma.vmem_to_hbm [thread:$0]  %s60, 128, %s62, [#allocation4]
    $region21: #{tpu_custom_call.1} parent=1 // pred_fallthru
      _
    // Predicated region
    $region22: #{tpu_custom_call.1} parent=1 // pred_check
      _
    $region23: #{tpu_custom_call.1} parent=1 // pred_check_branch
      %66 = sbr.rel (0) target = $region25
    $region24: #{tpu_custom_call.1} parent=1 // pred_region
      %68 = dma.done [#allocation4], 128
    $region25: #{tpu_custom_call.1} parent=1 // pred_fallthru
      _
    %69 = vsyncpa [#allocation3], 1
    %70 = vsyncpa [#allocation6], 1
    %71 = vsyncpa [#allocation4], 1

</llo_original>
